<compile_context>
chip_gen: v6e
topology: v6e:2x2x1
jax: 0.10.0
libtpu: 0.0.40
codegen_flags: <defaults>
</compile_context>

<pallas_src>
import jax
import jax.numpy as jnp
from jax.experimental import pallas as pl
from jax.experimental.pallas import tpu as pltpu

_EPS = 1e-5


def _pick_t_tile(T, small, big, budget_bytes=12 * 1024 * 1024):
    """Largest lane-dense (multiple-of-128) time tile that divides T and keeps the
    heaviest pass's working set (double-buffered x/out tiles + in-kernel h/y
    temporaries + double-buffered weights) inside `budget_bytes`."""
    for tt in (1024, 512, 384, 256, 128):
        if T >= tt and T % tt == 0:
            est = (
                4 * small * tt * 4      # x-in + out tiles, double-buffered, f32
                + big * tt * 6          # in-kernel f32 h + bf16 copy fed to the MXU
                + small * tt * 4        # in-kernel f32 y
                + 8 * big * small       # W1 + W2 (bf16), double-buffered
                + (1 << 16)             # bias / fold constants / stats / slack
            )
            if est <= budget_bytes:
                return tt
    # Budget is advisory: fall back to the smallest lane-dense tile, or the full
    # axis when T is not a multiple of 128 (block dims == full dims is legal).
    return 128 if (T >= 128 and T % 128 == 0) else T


def _resident_spec(shape, single_buffer=False):
    """BlockSpec for an operand whose block never changes (weights / bias / fold
    constants).  With single_buffer=True, request a 1-deep pipeline buffer so the
    pointless second copy does not burn VMEM; silently falls back if the running
    JAX has no pipeline_mode/Buffered support."""
    index_map = lambda n, t: (0,) * len(shape)
    if single_buffer and hasattr(pl, "Buffered"):
        try:
            return pl.BlockSpec(shape, index_map, pipeline_mode=pl.Buffered(1))
        except TypeError:
            pass
    return pl.BlockSpec(shape, index_map)


# ---- pass 1: h = relu(W1@x + b1); accumulate BN1 per-channel sum / sumsq ------
def _bn1_stats_kernel(x_ref, w1_ref, b1_ref, stats_ref, acc_ref):
    t = pl.program_id(1)

    @pl.when(t == 0)
    def _init():
        acc_ref[...] = jnp.zeros_like(acc_ref)

    h = jnp.dot(w1_ref[...], x_ref[...].astype(w1_ref.dtype),
                preferred_element_type=jnp.float32)
    h = jnp.maximum(h + b1_ref[...], 0.0)                       # (big, TT) f32

    acc_ref[:, 0:1] += jnp.sum(h, axis=-1, keepdims=True)
    acc_ref[:, 1:2] += jnp.sum(h * h, axis=-1, keepdims=True)

    @pl.when(t == pl.num_programs(1) - 1)
    def _flush():
        stats_ref[...] = acc_ref[...]


# ---- pass 2: recompute h, y = W2'@h + c1 (BN1 folded); accumulate BN2 stats ---
def _bn2_stats_kernel(x_ref, w1_ref, b1_ref, w2_ref, c1_ref, stats_ref, acc_ref):
    t = pl.program_id(1)

    @pl.when(t == 0)
    def _init():
        acc_ref[...] = jnp.zeros_like(acc_ref)

    h = jnp.dot(w1_ref[...], x_ref[...].astype(w1_ref.dtype),
                preferred_element_type=jnp.float32)
    h = jnp.maximum(h + b1_ref[...], 0.0)
    y = jnp.dot(w2_ref[...], h.astype(w2_ref.dtype),
                preferred_element_type=jnp.float32) + c1_ref[...]   # (small, TT)

    acc_ref[:, 0:1] += jnp.sum(y, axis=-1, keepdims=True)
    acc_ref[:, 1:2] += jnp.sum(y * y, axis=-1, keepdims=True)

    @pl.when(t == pl.num_programs(1) - 1)
    def _flush():
        stats_ref[...] = acc_ref[...]


# ---- pass 3: recompute h, emit out = W2''@h + c2 (BN1 + BN2 both folded) ------
def _out_kernel(x_ref, w1_ref, b1_ref, w2_ref, c2_ref, o_ref):
    h = jnp.dot(w1_ref[...], x_ref[...].astype(w1_ref.dtype),
                preferred_element_type=jnp.float32)
    h = jnp.maximum(h + b1_ref[...], 0.0)
    y = jnp.dot(w2_ref[...], h.astype(w2_ref.dtype),
                preferred_element_type=jnp.float32) + c2_ref[...]
    o_ref[...] = y.astype(o_ref.dtype)


def prefinal_layer(x, w1, b1, w2, *, eps=_EPS, t_tile=None,
                   matmul_dtype=jnp.bfloat16, single_buffer_weights=False,
                   vmem_limit_bytes=None):
    """Pallas equivalent of PrefinalLayer.forward (training-mode BatchNorm).

    x:  [N, small_dim, T]     (NCT, as fed to the PyTorch module)
    w1: [big_dim, small_dim]  (nn.Linear weight)
    b1: [big_dim]             (nn.Linear bias)
    w2: [small_dim, big_dim]  (1x1 Conv1d weight, kernel dim squeezed)
    returns: [N, small_dim, T]
    """
    N, small, T = x.shape
    big = w1.shape[0]
    assert w1.shape == (big, small)
    assert b1.shape == (big,)
    assert w2.shape == (small, big)

    if t_tile is None:
        t_tile = _pick_t_tile(T, small, big)
    assert T % t_tile == 0
    grid = (N, T // t_tile)
    count = N * T

    def cparams(semantics):
        kw = dict(dimension_semantics=semantics)
        if vmem_limit_bytes is not None:
            kw["vmem_limit_bytes"] = vmem_limit_bytes
        return pltpu.CompilerParams(**kw)

    x_spec = pl.BlockSpec((None, small, t_tile), lambda n, t: (n, 0, t))
    res = lambda shape: _resident_spec(shape, single_buffer_weights)

    w1_m = w1.astype(matmul_dtype)
    b1_col = b1.reshape(big, 1).astype(jnp.float32)

    # -- pass 1: BN1 per-channel sum / sum-of-squares (h never leaves VMEM) -----
    stats1 = pl.pallas_call(
        _bn1_stats_kernel,
        grid=grid,
        in_specs=[x_spec, res((big, small)), res((big, 1))],
        out_specs=pl.BlockSpec((None, big, 2), lambda n, t: (n, 0, 0)),
        out_shape=jax.ShapeDtypeStruct((N, big, 2), jnp.float32),
        scratch_shapes=[pltpu.VMEM((big, 2), jnp.float32)],
        compiler_params=cparams(("parallel", "arbitrary")),
    )(x, w1_m, b1_col)

    # Tiny [big]-sized glue; biased variance, as in PyTorch BatchNorm training
    # mode.  (E[x^2]-E[x]^2 in f32 with a non-negativity clamp; adequate here.)
    mean1 = jnp.sum(stats1[:, :, 0], axis=0) / count
    var1 = jnp.maximum(jnp.sum(stats1[:, :, 1], axis=0) / count - mean1 * mean1, 0.0)
    rstd1 = jax.lax.rsqrt(var1 + eps)

    # Fold BN1 into the 1x1 conv:  W2 @ ((h - mean1) * rstd1) == W2a @ h + c1
    w2a = w2.astype(jnp.float32) * rstd1[None, :]
    c1 = -jnp.dot(w2a, mean1)
    w2a_m = w2a.astype(matmul_dtype)
    c1_col = c1.reshape(small, 1).astype(jnp.float32)

    # -- pass 2: BN2 per-channel sum / sum-of-squares (y never leaves VMEM) -----
    stats2 = pl.pallas_call(
        _bn2_stats_kernel,
        grid=grid,
        in_specs=[x_spec, res((big, small)), res((big, 1)),
                  res((small, big)), res((small, 1))],
        out_specs=pl.BlockSpec((None, small, 2), lambda n, t: (n, 0, 0)),
        out_shape=jax.ShapeDtypeStruct((N, small, 2), jnp.float32),
        scratch_shapes=[pltpu.VMEM((small, 2), jnp.float32)],
        compiler_params=cparams(("parallel", "arbitrary")),
    )(x, w1_m, b1_col, w2a_m, c1_col)

    mean2 = jnp.sum(stats2[:, :, 0], axis=0) / count
    var2 = jnp.maximum(jnp.sum(stats2[:, :, 1], axis=0) / count - mean2 * mean2, 0.0)
    rstd2 = jax.lax.rsqrt(var2 + eps)

    # Fold BN2 as well:  out = rstd2 * (W2a @ h + c1 - mean2) == W2b @ h + c2
    w2b_m = (w2a * rstd2[:, None]).astype(matmul_dtype)
    c2_col = ((c1 - mean2) * rstd2).reshape(small, 1).astype(jnp.float32)

    # -- pass 3: emit the output directly (fully parallel elementwise+MXU stream)
    out = pl.pallas_call(
        _out_kernel,
        grid=grid,
        in_specs=[x_spec, res((big, small)), res((big, 1)),
                  res((small, big)), res((small, 1))],
        out_specs=pl.BlockSpec((None, small, t_tile), lambda n, t: (n, 0, t)),
        out_shape=jax.ShapeDtypeStruct((N, small, T), x.dtype),
        compiler_params=cparams(("parallel", "parallel")),
    )(x, w1_m, b1_col, w2b_m, c2_col)

    return out


# ---------------------------- pure-JAX reference -------------------------------
def _prefinal_reference(x, w1, b1, w2, eps=_EPS):
    h = jnp.einsum("nct,oc->not", x, w1) + b1[None, :, None]
    h = jnp.maximum(h, 0.0)
    m1 = jnp.mean(h, axis=(0, 2), keepdims=True)
    v1 = jnp.mean((h - m1) ** 2, axis=(0, 2), keepdims=True)
    hb = (h - m1) / jnp.sqrt(v1 + eps)
    y = jnp.einsum("nct,oc->not", hb, w2)
    m2 = jnp.mean(y, axis=(0, 2), keepdims=True)
    v2 = jnp.mean((y - m2) ** 2, axis=(0, 2), keepdims=True)
    return (y - m2) / jnp.sqrt(v2 + eps)


if __name__ == "__main__":
    key = jax.random.PRNGKey(0)
    k_x, k_w1, k_b1, k_w2 = jax.random.split(key, 4)

    N, small_dim, big_dim, T = 2, 64, 128, 256
    x = jax.random.normal(k_x, (N, small_dim, T), dtype=jnp.float32)
    w1 = jax.random.normal(k_w1, (big_dim, small_dim), dtype=jnp.float32) * (small_dim ** -0.5)
    b1 = jax.random.normal(k_b1, (big_dim,), dtype=jnp.float32) * 0.1
    w2 = jax.random.normal(k_w2, (small_dim, big_dim), dtype=jnp.float32) * (big_dim ** -0.5)

    ref = jax.block_until_ready(_prefinal_reference(x, w1, b1, w2))

    # Production path: bf16 MXU operands, f32 accumulation and BN math.
    # Tolerance budget: bf16 input rounding through two matmul layers (plus the
    # backend-default precision of the f32 einsum reference) -> ~2-3e-2 worst case.
    out = jax.block_until_ready(prefinal_layer(x, w1, b1, w2))
    assert out.shape == (N, small_dim, T)
    assert bool(jnp.allclose(out, ref, rtol=5e-2, atol=5e-2)), \
        float(jnp.max(jnp.abs(out - ref)))

    # Conservative path: f32 MXU operands (exercises the matmul_dtype knob and
    # checks the kernel structure more tightly).
    out32 = jax.block_until_ready(
        prefinal_layer(x, w1, b1, w2, matmul_dtype=jnp.float32))
    assert out32.shape == (N, small_dim, T)
    assert bool(jnp.allclose(out32, ref, rtol=3e-2, atol=3e-2)), \
        float(jnp.max(jnp.abs(out32 - ref)))

    print("KERNEL_OK")
</pallas_src>

<mosaic_0001>
module attributes {stable_mosaic.version = 11 : i64} {
  func.func @_bn1_stats_kernel(%arg0: i32, %arg1: i32, %arg2: memref<1x64x256xf32, #tpu.memory_space<vmem>>, %arg3: memref<128x64xbf16, #tpu.memory_space<vmem>>, %arg4: memref<128x1xf32, #tpu.memory_space<vmem>>, %arg5: memref<1x128x2xf32, #tpu.memory_space<vmem>>, %arg6: memref<128x2xf32, #tpu.memory_space<vmem>>) attributes {dimension_semantics = [#tpu.dimension_semantics<parallel>, #tpu.dimension_semantics<arbitrary>], iteration_bounds = array<i64: 2, 1>, scalar_prefetch = 0 : i64, scratch_operands = 1 : i64, tpu.core_type = #tpu.core_type<tc>, window_params = [{transform_indices = @transform_0, window_bounds = array<i64: 1, 64, 256>}, {pipeline_mode = #tpu.pipeline_mode<synchronous>, transform_indices = @transform_1, window_bounds = array<i64: 128, 64>}, {pipeline_mode = #tpu.pipeline_mode<synchronous>, transform_indices = @transform_2, window_bounds = array<i64: 128, 1>}, {transform_indices = @transform_3, window_bounds = array<i64: 1, 128, 2>}]} {
    %c0_i32 = arith.constant 0 : i32
    %0 = arith.cmpi eq, %arg1, %c0_i32 : i32
    %1 = arith.extui %0 : i1 to i32
    %c0_i32_0 = arith.constant 0 : i32
    %2 = arith.cmpi ne, %1, %c0_i32_0 : i32
    scf.if %2 {
      %cst_19 = arith.constant 0.000000e+00 : f32
      %27 = vector.broadcast %cst_19 : f32 to vector<128x2xf32>
      %c0_20 = arith.constant 0 : index
      %c0_21 = arith.constant 0 : index
      %28 = vector.load %arg6[%c0_20, %c0_21] : memref<128x2xf32, #tpu.memory_space<vmem>>, vector<128x2xf32>
      tpu.vector_store %arg6[%c0_20, %c0_21], %27 {strides = array<i32>} : memref<128x2xf32, #tpu.memory_space<vmem>>, vector<128x2xf32>,
    } else {
    }
    %c0 = arith.constant 0 : index
    %c0_1 = arith.constant 0 : index
    %3 = vector.load %arg3[%c0, %c0_1] : memref<128x64xbf16, #tpu.memory_space<vmem>>, vector<128x64xbf16>
    %c0_2 = arith.constant 0 : index
    %c0_3 = arith.constant 0 : index
    %c0_4 = arith.constant 0 : index
    %4 = vector.load %arg2[%c0_2, %c0_3, %c0_4] : memref<1x64x256xf32, #tpu.memory_space<vmem>>, vector<1x64x256xf32>
    %5 = vector.shape_cast %4 : vector<1x64x256xf32> to vector<64x256xf32>
    %6 = arith.truncf %5 : vector<64x256xf32> to vector<64x256xbf16>
    %cst = arith.constant dense<0.000000e+00> : vector<128x256xf32>
    %7 = tpu.matmul %3, %6, %cst {dimension_numbers = #tpu.dot_dimension_numbers<[1], [0], [0], [1], [0, 0, 1, 1], [], []>} : vector<128x64xbf16>, vector<64x256xbf16>, vector<128x256xf32> -> vector<128x256xf32>
    %c0_5 = arith.constant 0 : index
    %c0_6 = arith.constant 0 : index
    %8 = vector.load %arg4[%c0_5, %c0_6] : memref<128x1xf32, #tpu.memory_space<vmem>>, vector<128x1xf32>
    %9 = vector.broadcast %8 : vector<128x1xf32> to vector<128x256xf32>
    %10 = arith.addf %7, %9 : vector<128x256xf32>
    %cst_7 = arith.constant 0.000000e+00 : f32
    %11 = vector.broadcast %cst_7 : f32 to vector<128x256xf32>
    %12 = arith.maximumf %10, %11 : vector<128x256xf32>
    %c0_8 = arith.constant 0 : index
    %c0_9 = arith.constant 0 : index
    %13 = vector.load %arg6[%c0_8, %c0_9] : memref<128x2xf32, #tpu.memory_space<vmem>>, vector<128x1xf32>
    %cst_10 = arith.constant dense<0.000000e+00> : vector<128xf32>
    %14 = vector.multi_reduction <add>, %12, %cst_10 [1] : vector<128x256xf32> to vector<128xf32>
    %15 = vector.shape_cast %14 : vector<128xf32> to vector<128x1xf32>
    %16 = arith.addf %13, %15 : vector<128x1xf32>
    %c0_11 = arith.constant 0 : index
    %c0_12 = arith.constant 0 : index
    %17 = vector.load %arg6[%c0_11, %c0_12] : memref<128x2xf32, #tpu.memory_space<vmem>>, vector<128x1xf32>
    tpu.vector_store %arg6[%c0_11, %c0_12], %16 {strides = array<i32>} : memref<128x2xf32, #tpu.memory_space<vmem>>, vector<128x1xf32>,
    %c0_13 = arith.constant 0 : index
    %c1 = arith.constant 1 : index
    %18 = vector.load %arg6[%c0_13, %c1] : memref<128x2xf32, #tpu.memory_space<vmem>>, vector<128x1xf32>
    %19 = arith.mulf %12, %12 : vector<128x256xf32>
    %cst_14 = arith.constant dense<0.000000e+00> : vector<128xf32>
    %20 = vector.multi_reduction <add>, %19, %cst_14 [1] : vector<128x256xf32> to vector<128xf32>
    %21 = vector.shape_cast %20 : vector<128xf32> to vector<128x1xf32>
    %22 = arith.addf %18, %21 : vector<128x1xf32>
    %c0_15 = arith.constant 0 : index
    %c1_16 = arith.constant 1 : index
    %23 = vector.load %arg6[%c0_15, %c1_16] : memref<128x2xf32, #tpu.memory_space<vmem>>, vector<128x1xf32>
    tpu.vector_store %arg6[%c0_15, %c1_16], %22 {strides = array<i32>} : memref<128x2xf32, #tpu.memory_space<vmem>>, vector<128x1xf32>,
    %c0_i32_17 = arith.constant 0 : i32
    %24 = arith.cmpi eq, %arg1, %c0_i32_17 : i32
    %25 = arith.extui %24 : i1 to i32
    %c0_i32_18 = arith.constant 0 : i32
    %26 = arith.cmpi ne, %25, %c0_i32_18 : i32
    scf.if %26 {
      %c0_19 = arith.constant 0 : index
      %c0_20 = arith.constant 0 : index
      %27 = vector.load %arg6[%c0_19, %c0_20] : memref<128x2xf32, #tpu.memory_space<vmem>>, vector<128x2xf32>
      %c0_21 = arith.constant 0 : index
      %c0_22 = arith.constant 0 : index
      %c0_23 = arith.constant 0 : index
      %28 = vector.load %arg5[%c0_21, %c0_22, %c0_23] : memref<1x128x2xf32, #tpu.memory_space<vmem>>, vector<1x128x2xf32>
      %29 = vector.shape_cast %28 : vector<1x128x2xf32> to vector<128x2xf32>
      %30 = vector.shape_cast %27 : vector<128x2xf32> to vector<1x128x2xf32>
      tpu.vector_store %arg5[%c0_21, %c0_22, %c0_23], %30 {strides = array<i32>} : memref<1x128x2xf32, #tpu.memory_space<vmem>>, vector<1x128x2xf32>,
    } else {
    }
    return
  }
  func.func @transform_0(%arg0: i32, %arg1: i32) -> (i32, i32, i32) {
    %c0_i32 = arith.constant 0 : i32
    %c0_i32_0 = arith.constant 0 : i32
    return %arg0, %c0_i32, %arg1 : i32, i32, i32
  }
  func.func @transform_1(%arg0: i32, %arg1: i32) -> (i32, i32) {
    %c0_i32 = arith.constant 0 : i32
    %c0_i32_0 = arith.constant 0 : i32
    %c0_i32_1 = arith.constant 0 : i32
    return %c0_i32, %c0_i32_0 : i32, i32
  }
  func.func @transform_2(%arg0: i32, %arg1: i32) -> (i32, i32) {
    %c0_i32 = arith.constant 0 : i32
    %c0_i32_0 = arith.constant 0 : i32
    %c0_i32_1 = arith.constant 0 : i32
    return %c0_i32, %c0_i32_0 : i32, i32
  }
  func.func @transform_3(%arg0: i32, %arg1: i32) -> (i32, i32, i32) {
    %c0_i32 = arith.constant 0 : i32
    %c0_i32_0 = arith.constant 0 : i32
    %c0_i32_1 = arith.constant 0 : i32
    return %arg0, %c0_i32, %c0_i32_0 : i32, i32, i32
  }
}

</mosaic_0001>

<llo_original>
// kernel: tpu_custom_call.1
$region0: #{tpu_custom_call.1}
  #allocation0 [shape = 'u32[]', space=smem, size = 0x4, offset = 0x4, fixed_abs, tag = 'smem constant byte address 0x4 - core index']
  #allocation1 [shape = 'u32[144,128]{1,0:T(1,128)}', space=vmem, size = 0x12000, scoped, tag = 'internal scratch']
  #allocation2 [shape = 'f32[128,2]{1,0:T(8,128)}', space=vmem, size = 0x10000, scoped, tag = 'scratch operand']
  %s0 = inlined_call_operand.hbm [shape: f32[2,64,256], index: 0, kind: input, shape index: {}]
  %s1 = inlined_call_operand.vmem [shape: bf16[128,64], index: 1, kind: input, shape index: {}]
  %s2 = inlined_call_operand.vmem [shape: f32[128,1], index: 2, kind: input, shape index: {}]
  %s3 = inlined_call_operand.vmem [shape: f32[2,128,2], index: 3, kind: output, shape index: {}]
  %s4 = sld [smem:[#allocation0]]
  $region57: #{tpu_custom_call.1} parent=0
    _
  %s6 = ssub.s32 1, %s4
  %s7 = scalar_select 0, %s6, %s4
  $region1: #{tpu_custom_call.1} parent=0
    #allocation3 [shape = 'u8[131072]{0}', space=vmem, size = 0x20000, scoped, tag = 'input window, operand 0']
    #allocation4 [shape = 's32[2]{0}', space=sflag, size = 0x8, scoped, tag = 'scoped memory for tpu_custom_call.1']
    %8 = vsyncpa [#allocation4], 0
    %s9 = scalar_lea.sflag [#allocation4], 1
    %10 = vsyncpa %s9, 0
    loop: start=0, step=1, limit=4
    $region2: #{tpu_custom_call.1} parent=1 // loop_pre_header
      _
    $region3: #{tpu_custom_call.1} parent=1 // loop_header
      %s12 = sphi 0, %s16
      %p13 = scmp.ge.s32.totalorder %s12, 4
      %s19 = sphi 0, %s31
      %s20 = sphi 0, %s27
      %s21 = sphi 0, %s19
      %s22 = sphi 0, %s20
      %s23 = sphi 0, %s21
      %s24 = sphi 0, %s22
      %s36 = sphi 0, %s38
      %s39 = sphi 0, %s36
      %s40 = sphi 0, %s39
      %s56 = sphi 0, %s40
      %s60 = sphi 0, %s60
      %s62 = sphi 0, %s60
      %s63 = sphi 0, %s62
      %s77 = sphi 0, %s63
      %s81 = sphi 0, %s81
      %s83 = sphi 0, %s81
      %s84 = sphi 0, %s83
      %s98 = sphi 0, %s84
      %s104 = sphi 0, %s106
      %s107 = sphi 0, %s104
      %s108 = sphi 0, %s107
      %s124 = sphi 0, %s108
    $region4: #{tpu_custom_call.1} parent=1 // loop_header_branch
      %15 = sbr.rel (%p13) target = $region8
    $region5: #{tpu_custom_call.1} parent=1 // loop_body
      %s17 = ssub.s32 %s12, 1
      %s18 = ssub.s32 %s12, 2
      %s25 = sadd.s32 1, %s20
      %p26 = scmp.ge.s32.totalorder %s25, 1
      %s27 = scalar_select %p26, 0, %s25
      %s28 = sadd.s32 1, %s19
      %s29 = scalar_select %p26, %s28, %s19
      %p30 = scmp.ge.s32.totalorder %s29, 2
      %s31 = scalar_select %p30, 0, %s29
      %s32 = ssub.s32 %s19, %s31
      %s33 = ssub.s32 %s20, %s27
      %s34 = sor.u32 %s32, %s33
      %p35 = scmp.eq.s32.totalorder %s34, 0
      %s37 = sadd.s32 %s36, 1
      %s38 = scalar_select %p35, %s36, %s37
      %p41 = pneg %p35
      %p42 = scmp.eq.s32.totalorder %s12, 1
      %p43 = por %p41, %p42
      %p44 = scmp.ne.s32.totalorder %s36, %s39
      %p45 = scmp.eq.s32.totalorder %s12, 0
      %p46 = por %p44, %p45
      %p47 = scmp.ne.s32.totalorder %s36, %s39
      %p48 = scmp.eq.s32.totalorder %s17, 1
      %p49 = por %p47, %p48
      %p50 = scmp.ne.s32.totalorder %s39, %s40
      %p51 = scmp.eq.s32.totalorder %s17, 0
      %p52 = por %p50, %p51
      %p53 = scmp.ne.s32.totalorder %s39, %s40
      %p54 = scmp.eq.s32.totalorder %s18, 1
      %p55 = por %p53, %p54
      %p57 = scmp.ne.s32.totalorder %s40, %s56
      %p58 = scmp.eq.s32.totalorder %s18, 0
      %p59 = por %p57, %p58
      %s61 = sadd.s32 %s60, 1
      %p64 = scmp.eq.s32.totalorder %s12, 1
      %p65 = scmp.ne.s32.totalorder %s60, %s62
      %p66 = scmp.eq.s32.totalorder %s12, 0
      %p67 = por %p65, %p66
      %p68 = scmp.ne.s32.totalorder %s60, %s62
      %p69 = scmp.eq.s32.totalorder %s17, 1
      %p70 = por %p68, %p69
      %p71 = scmp.ne.s32.totalorder %s62, %s63
      %p72 = scmp.eq.s32.totalorder %s17, 0
      %p73 = por %p71, %p72
      %p74 = scmp.ne.s32.totalorder %s62, %s63
      %p75 = scmp.eq.s32.totalorder %s18, 1
      %p76 = por %p74, %p75
      %p78 = scmp.ne.s32.totalorder %s63, %s77
      %p79 = scmp.eq.s32.totalorder %s18, 0
      %p80 = por %p78, %p79
      %s82 = sadd.s32 %s81, 1
      %p85 = scmp.eq.s32.totalorder %s12, 1
      %p86 = scmp.ne.s32.totalorder %s81, %s83
      %p87 = scmp.eq.s32.totalorder %s12, 0
      %p88 = por %p86, %p87
      %p89 = scmp.ne.s32.totalorder %s81, %s83
      %p90 = scmp.eq.s32.totalorder %s17, 1
      %p91 = por %p89, %p90
      %p92 = scmp.ne.s32.totalorder %s83, %s84
      %p93 = scmp.eq.s32.totalorder %s17, 0
      %p94 = por %p92, %p93
      %p95 = scmp.ne.s32.totalorder %s83, %s84
      %p96 = scmp.eq.s32.totalorder %s18, 1
      %p97 = por %p95, %p96
      %p99 = scmp.ne.s32.totalorder %s84, %s98
      %p100 = scmp.eq.s32.totalorder %s18, 0
      %p101 = por %p99, %p100
      %s102 = ssub.s32 %s19, %s31
      %p103 = scmp.eq.s32.totalorder %s102, 0
      %s105 = sadd.s32 %s104, 1
      %s106 = scalar_select %p103, %s104, %s105
      %p109 = pneg %p103
      %p110 = scmp.eq.s32.totalorder %s12, 1
      %p111 = por %p109, %p110
      %p112 = scmp.ne.s32.totalorder %s104, %s107
      %p113 = scmp.eq.s32.totalorder %s12, 0
      %p114 = por %p112, %p113
      %p115 = scmp.ne.s32.totalorder %s104, %s107
      %p116 = scmp.eq.s32.totalorder %s17, 1
      %p117 = por %p115, %p116
      %p118 = scmp.ne.s32.totalorder %s107, %s108
      %p119 = scmp.eq.s32.totalorder %s17, 0
      %p120 = por %p118, %p119
      %p121 = scmp.ne.s32.totalorder %s107, %s108
      %p122 = scmp.eq.s32.totalorder %s18, 1
      %p123 = por %p121, %p122
      %p125 = scmp.ne.s32.totalorder %s108, %s124
      %p126 = scmp.eq.s32.totalorder %s18, 0
      %p127 = por %p125, %p126
      %p128 = scmp.le.s32.totalorder 1, %s12
      %p129 = scmp.lt.s32.totalorder %s12, 3
      %p130 = pnand %p128, %p129
      %p131 = pneg %p130
      // Predicated region
      $region9: #{tpu_custom_call.1} parent=5 // pred_check
        _
      $region10: #{tpu_custom_call.1} parent=5 // pred_check_branch
        %133 = sbr.rel (%p130) target = $region12
      $region11: #{tpu_custom_call.1} parent=5 // pred_region
        %s134 = ssub.s32 %s12, 1
        // Predicated region
        $region13: #{tpu_custom_call.1} parent=11 // pred_check
          %p135 = pneg %p73
        $region14: #{tpu_custom_call.1} parent=11 // pred_check_branch
          %137 = sbr.rel (%p135) target = $region16
        $region15: #{tpu_custom_call.1} parent=11 // pred_region
          _
        $region16: #{tpu_custom_call.1} parent=11 // pred_fallthru
          _
        // Predicated region
        $region17: #{tpu_custom_call.1} parent=11 // pred_check
          %p138 = pneg %p94
        $region18: #{tpu_custom_call.1} parent=11 // pred_check_branch
          %140 = sbr.rel (%p138) target = $region20
        $region19: #{tpu_custom_call.1} parent=11 // pred_region
          _
        $region20: #{tpu_custom_call.1} parent=11 // pred_fallthru
          _
      $region12: #{tpu_custom_call.1} parent=5 // pred_fallthru
        _
      %p141 = scmp.lt.s32.totalorder %s12, 2
      // Predicated region
      $region21: #{tpu_custom_call.1} parent=5 // pred_check
        %p142 = pneg %p141
      $region22: #{tpu_custom_call.1} parent=5 // pred_check_branch
        %144 = sbr.rel (%p142) target = $region24
      $region23: #{tpu_custom_call.1} parent=5 // pred_region
        // Predicated region
        $region25: #{tpu_custom_call.1} parent=23 // pred_check
          %p145 = pneg %p46
        $region26: #{tpu_custom_call.1} parent=23 // pred_check_branch
          %147 = sbr.rel (%p145) target = $region28
        $region27: #{tpu_custom_call.1} parent=23 // pred_region
          %s148 = sand.u32 %s36, 1
          %s149 = scalar_lea.sflag [#allocation4], %s148
          %s150 = sand.u32 %s36, 1
          %s151 = smul.addr %s150, 128
          %s152 = scalar_lea.vmem [#allocation3], %s151
          %s153 = smul.u32 2, %s20
          %s155 = ssub.s32 2048, 2048
          %156 = vsyncadd %s149, %s155
          %s157 = smul.addr %s19, 16
          %s158 = sadd.s32 %s153, %s157
          %s159 = smul.addr %s158, 128
          %s160 = scalar_lea.hbm %s0, %s159
          %s161 = sshll.u32 %s152, 4
          %s162 = int_to_ptr.vmem [resolvable:$true] %s161
          %167 = dma.hbm_to_vmem [thread:$0]  %s160, 2048, %s162, %s149, 256, 256, 16
        $region28: #{tpu_custom_call.1} parent=23 // pred_fallthru
          _
      $region24: #{tpu_custom_call.1} parent=5 // pred_fallthru
        _
      %p168 = scmp.le.s32.totalorder 1, %s12
      %p169 = scmp.lt.s32.totalorder %s12, 3
      %p170 = pnand %p168, %p169
      %p171 = pneg %p170
      // Predicated region
      $region29: #{tpu_custom_call.1} parent=5 // pred_check
        _
      $region30: #{tpu_custom_call.1} parent=5 // pred_check_branch
        %173 = sbr.rel (%p170) target = $region32
      $region31: #{tpu_custom_call.1} parent=5 // pred_region
        %s174 = ssub.s32 %s12, 1
        %s175 = sand.u32 %s39, 1
        %s176 = scalar_lea.sflag [#allocation4], %s175
        %s177 = sand.u32 %s39, 1
        %s178 = smul.addr %s177, 128
        %s179 = scalar_lea.vmem [#allocation3], %s178
        // Predicated region
        $region33: #{tpu_custom_call.1} parent=31 // pred_check
          %p180 = pneg %p52
        $region34: #{tpu_custom_call.1} parent=31 // pred_check_branch
          %182 = sbr.rel (%p180) target = $region36
        $region35: #{tpu_custom_call.1} parent=31 // pred_region
          %183 = dma.done %s176, 2048
        $region36: #{tpu_custom_call.1} parent=31 // pred_fallthru
          _
        %s184 = sand.u32 %s39, 1
        %s185 = scalar_lea.sflag [#allocation4], %s184
        %s186 = sand.u32 %s39, 1
        %s187 = smul.addr %s186, 128
        %s188 = scalar_lea.vmem [#allocation3], %s187
        %p189 = pneg %p52
        %p190 = pneg %p49
        %p191 = pneg %p73
        %p192 = pneg %p70
        %p193 = pneg %p94
        %p194 = pneg %p91
        %p195 = pneg %p120
        %p196 = pneg %p117
        %p197 = scmp.lt.s32.totalorder %s21, 1
        %s198 = scalar_select %p197, %s21, 1
        %s199 = smul.addr %s198, 16
        %s200 = smul.addr %s199, 8
        %s201 = scalar_lea.vmem %s3, %s200
        %s202 = smul.u32 2, %s22
        %p203 = scmp.lt.s32.totalorder %s21, 1
        %s204 = scalar_select %p203, %s21, 1
        %s205 = smul.addr %s204, 16
        %s206 = smul.addr %s205, 8
        %s207 = scalar_lea.vmem %s3, %s206
        %p209 = scmp.eq.s32.totalorder %s22, 0
        // Predicated region
        $region37: #{tpu_custom_call.1} parent=31 // pred_check
          %p210 = pneg %p209
        $region38: #{tpu_custom_call.1} parent=31 // pred_check_branch
          %212 = sbr.rel (%p210) target = $region40
        $region39: #{tpu_custom_call.1} parent=31 // pred_region
          %vm213 = vcmask 15360
          %214 = vst.msk [vmem:[#allocation2] sm:$0xff] %vm213, 0.0
          %215 = vst.msk [vmem:[#allocation2 + $0x8] sm:$0xff] %vm213, 0.0
          %216 = vst.msk [vmem:[#allocation2 + $0x10] sm:$0xff] %vm213, 0.0
          %217 = vst.msk [vmem:[#allocation2 + $0x18] sm:$0xff] %vm213, 0.0
          %218 = vst.msk [vmem:[#allocation2 + $0x20] sm:$0xff] %vm213, 0.0
          %219 = vst.msk [vmem:[#allocation2 + $0x28] sm:$0xff] %vm213, 0.0
          %220 = vst.msk [vmem:[#allocation2 + $0x30] sm:$0xff] %vm213, 0.0
          %221 = vst.msk [vmem:[#allocation2 + $0x38] sm:$0xff] %vm213, 0.0
          %222 = vst.msk [vmem:[#allocation2 + $0x40] sm:$0xff] %vm213, 0.0
          %223 = vst.msk [vmem:[#allocation2 + $0x48] sm:$0xff] %vm213, 0.0
          %224 = vst.msk [vmem:[#allocation2 + $0x50] sm:$0xff] %vm213, 0.0
          %225 = vst.msk [vmem:[#allocation2 + $0x58] sm:$0xff] %vm213, 0.0
          %226 = vst.msk [vmem:[#allocation2 + $0x60] sm:$0xff] %vm213, 0.0
          %227 = vst.msk [vmem:[#allocation2 + $0x68] sm:$0xff] %vm213, 0.0
          %228 = vst.msk [vmem:[#allocation2 + $0x70] sm:$0xff] %vm213, 0.0
          %229 = vst.msk [vmem:[#allocation2 + $0x78] sm:$0xff] %vm213, 0.0
        $region40: #{tpu_custom_call.1} parent=31 // pred_fallthru
          _
        %v230 = vld [vmem:[%s1] sm:$0xf]
        %v231 = vld [vmem:[%s1 + $0x4] sm:$0xf]
        %v232 = vld [vmem:[%s1 + $0x8] sm:$0xf]
        %v233 = vld [vmem:[%s1 + $0xc] sm:$0xf]
        %v234 = vld [vmem:[%s1 + $0x10] sm:$0xf]
        %v235 = vld [vmem:[%s1 + $0x14] sm:$0xf]
        %v236 = vld [vmem:[%s1 + $0x18] sm:$0xf]
        %v237 = vld [vmem:[%s1 + $0x1c] sm:$0xf]
        %v238 = vld [vmem:[%s1 + $0x20] sm:$0xf]
        %v239 = vld [vmem:[%s1 + $0x24] sm:$0xf]
        %v240 = vld [vmem:[%s1 + $0x28] sm:$0xf]
        %v241 = vld [vmem:[%s1 + $0x2c] sm:$0xf]
        %v242 = vld [vmem:[%s1 + $0x30] sm:$0xf]
        %v243 = vld [vmem:[%s1 + $0x34] sm:$0xf]
        %v244 = vld [vmem:[%s1 + $0x38] sm:$0xf]
        %v245 = vld [vmem:[%s1 + $0x3c] sm:$0xf]
        %v246 = vld [vmem:[%s179] sm:$0xff]
        %v247 = vld [vmem:[%s179 + $0x8] sm:$0xff]
        %v248 = vld [vmem:[%s179 + $0x10] sm:$0xff]
        %v249 = vld [vmem:[%s179 + $0x18] sm:$0xff]
        %v250 = vld [vmem:[%s179 + $0x20] sm:$0xff]
        %v251 = vld [vmem:[%s179 + $0x28] sm:$0xff]
        %v252 = vld [vmem:[%s179 + $0x30] sm:$0xff]
        %v253 = vld [vmem:[%s179 + $0x38] sm:$0xff]
        %v254 = vld [vmem:[%s179 + $0x40] sm:$0xff]
        %v255 = vld [vmem:[%s179 + $0x48] sm:$0xff]
        %v256 = vld [vmem:[%s179 + $0x50] sm:$0xff]
        %v257 = vld [vmem:[%s179 + $0x58] sm:$0xff]
        %v258 = vld [vmem:[%s179 + $0x60] sm:$0xff]
        %v259 = vld [vmem:[%s179 + $0x68] sm:$0xff]
        %v260 = vld [vmem:[%s179 + $0x70] sm:$0xff]
        %v261 = vld [vmem:[%s179 + $0x78] sm:$0xff]
        %v262 = vpack.c.bf16 %v248, %v246
        %v263 = vpack.c.bf16 %v249, %v247
        %v264 = vpack.c.bf16 %v252, %v250
        %v265 = vpack.c.bf16 %v253, %v251
        %v266 = vpack.c.bf16 %v256, %v254
        %v267 = vpack.c.bf16 %v257, %v255
        %v268 = vpack.c.bf16 %v260, %v258
        %v269 = vpack.c.bf16 %v261, %v259
        %v270 = vld [vmem:[%s2] sm:$0xff]
        %v271 = vld [vmem:[%s2 + $0x8] sm:$0xff]
        %v272 = vld [vmem:[%s2 + $0x10] sm:$0xff]
        %v273 = vld [vmem:[%s2 + $0x18] sm:$0xff]
        %v274 = vld [vmem:[%s2 + $0x20] sm:$0xff]
        %v275 = vld [vmem:[%s2 + $0x28] sm:$0xff]
        %v276 = vld [vmem:[%s2 + $0x30] sm:$0xff]
        %v277 = vld [vmem:[%s2 + $0x38] sm:$0xff]
        %v278 = vld [vmem:[%s2 + $0x40] sm:$0xff]
        %v279 = vld [vmem:[%s2 + $0x48] sm:$0xff]
        %v280 = vld [vmem:[%s2 + $0x50] sm:$0xff]
        %v281 = vld [vmem:[%s2 + $0x58] sm:$0xff]
        %v282 = vld [vmem:[%s2 + $0x60] sm:$0xff]
        %v283 = vld [vmem:[%s2 + $0x68] sm:$0xff]
        %v284 = vld [vmem:[%s2 + $0x70] sm:$0xff]
        %v285 = vld [vmem:[%s2 + $0x78] sm:$0xff]
        %287 = vset.pattern.permute.xlu0 0
        %288 = vperm.xlu0 %287, %v270
        %v289 = vpop.permute.xlu0 %288
        %292 = vset.pattern.permute.xlu0 0
        %293 = vperm.xlu0 %292, %v271
        %v294 = vpop.permute.xlu0 %293
        %297 = vset.pattern.permute.xlu0 0
        %298 = vperm.xlu0 %297, %v272
        %v299 = vpop.permute.xlu0 %298
        %302 = vset.pattern.permute.xlu0 0
        %303 = vperm.xlu0 %302, %v273
        %v304 = vpop.permute.xlu0 %303
        %307 = vset.pattern.permute.xlu0 0
        %308 = vperm.xlu0 %307, %v274
        %v309 = vpop.permute.xlu0 %308
        %312 = vset.pattern.permute.xlu0 0
        %313 = vperm.xlu0 %312, %v275
        %v314 = vpop.permute.xlu0 %313
        %317 = vset.pattern.permute.xlu0 0
        %318 = vperm.xlu0 %317, %v276
        %v319 = vpop.permute.xlu0 %318
        %322 = vset.pattern.permute.xlu0 0
        %323 = vperm.xlu0 %322, %v277
        %v324 = vpop.permute.xlu0 %323
        %327 = vset.pattern.permute.xlu0 0
        %328 = vperm.xlu0 %327, %v278
        %v329 = vpop.permute.xlu0 %328
        %332 = vset.pattern.permute.xlu0 0
        %333 = vperm.xlu0 %332, %v279
        %v334 = vpop.permute.xlu0 %333
        %337 = vset.pattern.permute.xlu0 0
        %338 = vperm.xlu0 %337, %v280
        %v339 = vpop.permute.xlu0 %338
        %342 = vset.pattern.permute.xlu0 0
        %343 = vperm.xlu0 %342, %v281
        %v344 = vpop.permute.xlu0 %343
        %347 = vset.pattern.permute.xlu0 0
        %348 = vperm.xlu0 %347, %v282
        %v349 = vpop.permute.xlu0 %348
        %352 = vset.pattern.permute.xlu0 0
        %353 = vperm.xlu0 %352, %v283
        %v354 = vpop.permute.xlu0 %353
        %357 = vset.pattern.permute.xlu0 0
        %358 = vperm.xlu0 %357, %v284
        %v359 = vpop.permute.xlu0 %358
        %362 = vset.pattern.permute.xlu0 0
        %363 = vperm.xlu0 %362, %v285
        %v364 = vpop.permute.xlu0 %363
        %v382 = vunpack.c.l.b16 %v230
        %v383 = vunpack.c.l.b16 %v231
        %v384 = vunpack.c.l.b16 %v232
        %v385 = vunpack.c.l.b16 %v233
        %v386 = vunpack.c.l.b16 %v234
        %v387 = vunpack.c.l.b16 %v235
        %v388 = vunpack.c.l.b16 %v236
        %v389 = vunpack.c.l.b16 %v237
        %v390 = vunpack.c.l.b16 %v238
        %v391 = vunpack.c.l.b16 %v239
        %v392 = vunpack.c.l.b16 %v240
        %v393 = vunpack.c.l.b16 %v241
        %v394 = vunpack.c.l.b16 %v242
        %v395 = vunpack.c.l.b16 %v243
        %v396 = vunpack.c.l.b16 %v244
        %v397 = vunpack.c.l.b16 %v245
        %v398 = vpack.c.b16 %v383, %v382
        %v399 = vpack.c.b16 %v385, %v384
        %v400 = vpack.c.b16 %v387, %v386
        %v401 = vpack.c.b16 %v389, %v388
        %v402 = vpack.c.b16 %v391, %v390
        %v403 = vpack.c.b16 %v393, %v392
        %v404 = vpack.c.b16 %v395, %v394
        %v405 = vpack.c.b16 %v397, %v396
        %vm406 = vcmask 523264
        %v408 = vsel %vm406, %v398, 0
        %v411 = vsel %vm406, %v399, 0
        %v414 = vsel %vm406, %v400, 0
        %v417 = vsel %vm406, %v401, 0
        %v420 = vsel %vm406, %v402, 0
        %v423 = vsel %vm406, %v403, 0
        %v426 = vsel %vm406, %v404, 0
        %v429 = vsel %vm406, %v405, 0
        %431 = vmatprep.subr.bf16.mxu0 0
        %432 = vmatpush1.bf16.msra.mxu0 0
        %433 = vmatprep.subr.bf16.mxu0 0
        %434 = vmatpush1.bf16.msra.mxu0 0
        %435 = vmatprep.subr.bf16.mxu0 0
        %436 = vmatpush1.bf16.msra.mxu0 0
        %437 = vmatprep.subr.bf16.mxu0 0
        %438 = vmatpush1.bf16.msra.mxu0 0
        %439 = vmatprep.subr.bf16.mxu0 %v269
        %440 = vmatpush1.bf16.msra.mxu0 %v268
        %441 = vmatprep.subr.bf16.mxu0 %v267
        %442 = vmatpush1.bf16.msra.mxu0 %v266
        %443 = vmatprep.subr.bf16.mxu0 %v265
        %444 = vmatpush1.bf16.msra.mxu0 %v264
        %445 = vmatprep.subr.bf16.mxu0 %v263
        %446 = vmatpush1.bf16.msra.mxu0 %v262
        %447 = vmatprep.subr.bf16.mxu0 0
        %448 = vmatpush2.bf16.msra.mxu0 0
        %449 = vmatprep.subr.bf16.mxu0 0
        %450 = vmatpush2.bf16.msra.mxu0 0
        %451 = vmatprep.subr.bf16.mxu0 0
        %452 = vmatpush2.bf16.msra.mxu0 0
        %453 = vmatprep.subr.bf16.mxu0 0
        %454 = vmatpush2.bf16.msra.mxu0 0
        %455 = vmatprep.subr.bf16.mxu0 0
        %456 = vmatpush2.bf16.msra.mxu0 0
        %457 = vmatprep.subr.bf16.mxu0 0
        %458 = vmatpush2.bf16.msra.mxu0 0
        %459 = vmatprep.subr.bf16.mxu0 0
        %460 = vmatpush2.bf16.msra.mxu0 0
        %461 = vmatprep.subr.bf16.mxu0 0
        %462 = vmatpush2.bf16.msra.mxu0 0
        %463 = vmatprep.mubr.bf16.mxu0 0
        %464 = vmatmul.mubr.bf16.gmra.mxu0 %v408
        %v465 = vpop.f32.mrf.mxu0
        %v466 = vadd.f32 %v289, %v465
        %v467 = vpop.f32.mrf.mxu0
        %v468 = vadd.f32 %v289, %v467
        %v469 = vpop.f32.mrf.mxu0
        %v470 = vadd.f32 %v294, %v469
        %v471 = vpop.f32.mrf.mxu0
        %v472 = vadd.f32 %v294, %v471
        %473 = vmatprep.mubr.bf16.mxu0 0
        %474 = vmatmul.mubr.bf16.gmra.mxu0 %v411
        %v475 = vpop.f32.mrf.mxu0
        %v476 = vadd.f32 %v299, %v475
        %v477 = vpop.f32.mrf.mxu0
        %v478 = vadd.f32 %v299, %v477
        %v479 = vpop.f32.mrf.mxu0
        %v480 = vadd.f32 %v304, %v479
        %v481 = vpop.f32.mrf.mxu0
        %v482 = vadd.f32 %v304, %v481
        %483 = vmatprep.mubr.bf16.mxu0 0
        %484 = vmatmul.mubr.bf16.gmra.mxu0 %v414
        %v485 = vpop.f32.mrf.mxu0
        %v486 = vadd.f32 %v309, %v485
        %v487 = vpop.f32.mrf.mxu0
        %v488 = vadd.f32 %v309, %v487
        %v489 = vpop.f32.mrf.mxu0
        %v490 = vadd.f32 %v314, %v489
        %v491 = vpop.f32.mrf.mxu0
        %v492 = vadd.f32 %v314, %v491
        %493 = vmatprep.mubr.bf16.mxu0 0
        %494 = vmatmul.mubr.bf16.gmra.mxu0 %v417
        %v495 = vpop.f32.mrf.mxu0
        %v496 = vadd.f32 %v319, %v495
        %v497 = vpop.f32.mrf.mxu0
        %v498 = vadd.f32 %v319, %v497
        %v499 = vpop.f32.mrf.mxu0
        %v500 = vadd.f32 %v324, %v499
        %v501 = vpop.f32.mrf.mxu0
        %v502 = vadd.f32 %v324, %v501
        %503 = vmatprep.mubr.bf16.mxu0 0
        %504 = vmatmul.mubr.bf16.gmra.mxu0 %v420
        %v505 = vpop.f32.mrf.mxu0
        %v506 = vadd.f32 %v329, %v505
        %v507 = vpop.f32.mrf.mxu0
        %v508 = vadd.f32 %v329, %v507
        %v509 = vpop.f32.mrf.mxu0
        %v510 = vadd.f32 %v334, %v509
        %v511 = vpop.f32.mrf.mxu0
        %v512 = vadd.f32 %v334, %v511
        %513 = vmatprep.mubr.bf16.mxu0 0
        %514 = vmatmul.mubr.bf16.gmra.mxu0 %v423
        %v515 = vpop.f32.mrf.mxu0
        %v516 = vadd.f32 %v339, %v515
        %v517 = vpop.f32.mrf.mxu0
        %v518 = vadd.f32 %v339, %v517
        %v519 = vpop.f32.mrf.mxu0
        %v520 = vadd.f32 %v344, %v519
        %v521 = vpop.f32.mrf.mxu0
        %v522 = vadd.f32 %v344, %v521
        %523 = vmatprep.mubr.bf16.mxu0 0
        %524 = vmatmul.mubr.bf16.gmra.mxu0 %v426
        %v525 = vpop.f32.mrf.mxu0
        %v526 = vadd.f32 %v349, %v525
        %v527 = vpop.f32.mrf.mxu0
        %v528 = vadd.f32 %v349, %v527
        %v529 = vpop.f32.mrf.mxu0
        %v530 = vadd.f32 %v354, %v529
        %v531 = vpop.f32.mrf.mxu0
        %v532 = vadd.f32 %v354, %v531
        %533 = vmatprep.mubr.bf16.mxu0 0
        %534 = vmatmul.mubr.bf16.gmra.mxu0 %v429
        %v535 = vpop.f32.mrf.mxu0
        %v536 = vadd.f32 %v359, %v535
        %v537 = vpop.f32.mrf.mxu0
        %v538 = vadd.f32 %v359, %v537
        %v539 = vpop.f32.mrf.mxu0
        %v540 = vadd.f32 %v364, %v539
        %v541 = vpop.f32.mrf.mxu0
        %v542 = vadd.f32 %v364, %v541
        %543 = vdwg.mxu0
        %v544 = vmax.f32 %v466, 0.0
        %v545 = vmax.f32 %v468, 0.0
        %v546 = vmax.f32 %v470, 0.0
        %v547 = vmax.f32 %v472, 0.0
        %v548 = vmax.f32 %v476, 0.0
        %v549 = vmax.f32 %v478, 0.0
        %v550 = vmax.f32 %v480, 0.0
        %v551 = vmax.f32 %v482, 0.0
        %v552 = vmax.f32 %v486, 0.0
        %v553 = vmax.f32 %v488, 0.0
        %v554 = vmax.f32 %v490, 0.0
        %v555 = vmax.f32 %v492, 0.0
        %v556 = vmax.f32 %v496, 0.0
        %v557 = vmax.f32 %v498, 0.0
        %v558 = vmax.f32 %v500, 0.0
        %v559 = vmax.f32 %v502, 0.0
        %v560 = vmax.f32 %v506, 0.0
        %v561 = vmax.f32 %v508, 0.0
        %v562 = vmax.f32 %v510, 0.0
        %v563 = vmax.f32 %v512, 0.0
        %v564 = vmax.f32 %v516, 0.0
        %v565 = vmax.f32 %v518, 0.0
        %v566 = vmax.f32 %v520, 0.0
        %v567 = vmax.f32 %v522, 0.0
        %v568 = vmax.f32 %v526, 0.0
        %v569 = vmax.f32 %v528, 0.0
        %v570 = vmax.f32 %v530, 0.0
        %v571 = vmax.f32 %v532, 0.0
        %v572 = vmax.f32 %v536, 0.0
        %v573 = vmax.f32 %v538, 0.0
        %v574 = vmax.f32 %v540, 0.0
        %v575 = vmax.f32 %v542, 0.0
        %v576 = vld [vmem:[#allocation2] sm:$0xff]
        %v577 = vld [vmem:[#allocation2 + $0x8] sm:$0xff]
        %v578 = vld [vmem:[#allocation2 + $0x10] sm:$0xff]
        %v579 = vld [vmem:[#allocation2 + $0x18] sm:$0xff]
        %v580 = vld [vmem:[#allocation2 + $0x20] sm:$0xff]
        %v581 = vld [vmem:[#allocation2 + $0x28] sm:$0xff]
        %v582 = vld [vmem:[#allocation2 + $0x30] sm:$0xff]
        %v583 = vld [vmem:[#allocation2 + $0x38] sm:$0xff]
        %v584 = vld [vmem:[#allocation2 + $0x40] sm:$0xff]
        %v585 = vld [vmem:[#allocation2 + $0x48] sm:$0xff]
        %v586 = vld [vmem:[#allocation2 + $0x50] sm:$0xff]
        %v587 = vld [vmem:[#allocation2 + $0x58] sm:$0xff]
        %v588 = vld [vmem:[#allocation2 + $0x60] sm:$0xff]
        %v589 = vld [vmem:[#allocation2 + $0x68] sm:$0xff]
        %v590 = vld [vmem:[#allocation2 + $0x70] sm:$0xff]
        %v591 = vld [vmem:[#allocation2 + $0x78] sm:$0xff]
        %v592 = vadd.f32 %v544, %v545
        %593 = vadd.xlane.f32.xlu0 %v592
        %v594 = vpop.xlane.xlu0 %593
        %v595 = vadd.f32 %v546, %v547
        %596 = vadd.xlane.f32.xlu0 %v595
        %v597 = vpop.xlane.xlu0 %596
        %v598 = vadd.f32 %v548, %v549
        %599 = vadd.xlane.f32.xlu0 %v598
        %v600 = vpop.xlane.xlu0 %599
        %v601 = vadd.f32 %v550, %v551
        %602 = vadd.xlane.f32.xlu0 %v601
        %v603 = vpop.xlane.xlu0 %602
        %v604 = vadd.f32 %v552, %v553
        %605 = vadd.xlane.f32.xlu0 %v604
        %v606 = vpop.xlane.xlu0 %605
        %v607 = vadd.f32 %v554, %v555
        %608 = vadd.xlane.f32.xlu0 %v607
        %v609 = vpop.xlane.xlu0 %608
        %v610 = vadd.f32 %v556, %v557
        %611 = vadd.xlane.f32.xlu0 %v610
        %v612 = vpop.xlane.xlu0 %611
        %v613 = vadd.f32 %v558, %v559
        %614 = vadd.xlane.f32.xlu0 %v613
        %v615 = vpop.xlane.xlu0 %614
        %v616 = vadd.f32 %v560, %v561
        %617 = vadd.xlane.f32.xlu0 %v616
        %v618 = vpop.xlane.xlu0 %617
        %v619 = vadd.f32 %v562, %v563
        %620 = vadd.xlane.f32.xlu0 %v619
        %v621 = vpop.xlane.xlu0 %620
        %v622 = vadd.f32 %v564, %v565
        %623 = vadd.xlane.f32.xlu0 %v622
        %v624 = vpop.xlane.xlu0 %623
        %v625 = vadd.f32 %v566, %v567
        %626 = vadd.xlane.f32.xlu0 %v625
        %v627 = vpop.xlane.xlu0 %626
        %v628 = vadd.f32 %v568, %v569
        %629 = vadd.xlane.f32.xlu0 %v628
        %v630 = vpop.xlane.xlu0 %629
        %v631 = vadd.f32 %v570, %v571
        %632 = vadd.xlane.f32.xlu0 %v631
        %v633 = vpop.xlane.xlu0 %632
        %v634 = vadd.f32 %v572, %v573
        %635 = vadd.xlane.f32.xlu0 %v634
        %v636 = vpop.xlane.xlu0 %635
        %v637 = vadd.f32 %v574, %v575
        %638 = vadd.xlane.f32.xlu0 %v637
        %v639 = vpop.xlane.xlu0 %638
        %v640 = vadd.f32 %v576, %v594
        %v641 = vadd.f32 %v577, %v597
        %v642 = vadd.f32 %v578, %v600
        %v643 = vadd.f32 %v579, %v603
        %v644 = vadd.f32 %v580, %v606
        %v645 = vadd.f32 %v581, %v609
        %v646 = vadd.f32 %v582, %v612
        %v647 = vadd.f32 %v583, %v615
        %v648 = vadd.f32 %v584, %v618
        %v649 = vadd.f32 %v585, %v621
        %v650 = vadd.f32 %v586, %v624
        %v651 = vadd.f32 %v587, %v627
        %v652 = vadd.f32 %v588, %v630
        %v653 = vadd.f32 %v589, %v633
        %v654 = vadd.f32 %v590, %v636
        %v655 = vadd.f32 %v591, %v639
        %vm656 = vcmask 7168
        %657 = vst.msk [vmem:[#allocation2] sm:$0xff] %vm656, %v640
        %658 = vst.msk [vmem:[#allocation2 + $0x8] sm:$0xff] %vm656, %v641
        %659 = vst.msk [vmem:[#allocation2 + $0x10] sm:$0xff] %vm656, %v642
        %660 = vst.msk [vmem:[#allocation2 + $0x18] sm:$0xff] %vm656, %v643
        %661 = vst.msk [vmem:[#allocation2 + $0x20] sm:$0xff] %vm656, %v644
        %662 = vst.msk [vmem:[#allocation2 + $0x28] sm:$0xff] %vm656, %v645
        %663 = vst.msk [vmem:[#allocation2 + $0x30] sm:$0xff] %vm656, %v646
        %664 = vst.msk [vmem:[#allocation2 + $0x38] sm:$0xff] %vm656, %v647
        %665 = vst.msk [vmem:[#allocation2 + $0x40] sm:$0xff] %vm656, %v648
        %666 = vst.msk [vmem:[#allocation2 + $0x48] sm:$0xff] %vm656, %v649
        %667 = vst.msk [vmem:[#allocation2 + $0x50] sm:$0xff] %vm656, %v650
        %668 = vst.msk [vmem:[#allocation2 + $0x58] sm:$0xff] %vm656, %v651
        %669 = vst.msk [vmem:[#allocation2 + $0x60] sm:$0xff] %vm656, %v652
        %670 = vst.msk [vmem:[#allocation2 + $0x68] sm:$0xff] %vm656, %v653
        %671 = vst.msk [vmem:[#allocation2 + $0x70] sm:$0xff] %vm656, %v654
        %672 = vst.msk [vmem:[#allocation2 + $0x78] sm:$0xff] %vm656, %v655
        %v673 = vld [vmem:[#allocation2] sm:$0xff]
        %v674 = vld [vmem:[#allocation2 + $0x8] sm:$0xff]
        %v675 = vld [vmem:[#allocation2 + $0x10] sm:$0xff]
        %v676 = vld [vmem:[#allocation2 + $0x18] sm:$0xff]
        %v677 = vld [vmem:[#allocation2 + $0x20] sm:$0xff]
        %v678 = vld [vmem:[#allocation2 + $0x28] sm:$0xff]
        %v679 = vld [vmem:[#allocation2 + $0x30] sm:$0xff]
        %v680 = vld [vmem:[#allocation2 + $0x38] sm:$0xff]
        %v681 = vld [vmem:[#allocation2 + $0x40] sm:$0xff]
        %v682 = vld [vmem:[#allocation2 + $0x48] sm:$0xff]
        %v683 = vld [vmem:[#allocation2 + $0x50] sm:$0xff]
        %v684 = vld [vmem:[#allocation2 + $0x58] sm:$0xff]
        %v685 = vld [vmem:[#allocation2 + $0x60] sm:$0xff]
        %v686 = vld [vmem:[#allocation2 + $0x68] sm:$0xff]
        %v687 = vld [vmem:[#allocation2 + $0x70] sm:$0xff]
        %v688 = vld [vmem:[#allocation2 + $0x78] sm:$0xff]
        %v689 = vmul.f32 %v544, %v544
        %v690 = vmul.f32 %v545, %v545
        %v691 = vmul.f32 %v546, %v546
        %v692 = vmul.f32 %v547, %v547
        %v693 = vmul.f32 %v548, %v548
        %v694 = vmul.f32 %v549, %v549
        %v695 = vmul.f32 %v550, %v550
        %v696 = vmul.f32 %v551, %v551
        %v697 = vmul.f32 %v552, %v552
        %v698 = vmul.f32 %v553, %v553
        %v699 = vmul.f32 %v554, %v554
        %v700 = vmul.f32 %v555, %v555
        %v701 = vmul.f32 %v556, %v556
        %v702 = vmul.f32 %v557, %v557
        %v703 = vmul.f32 %v558, %v558
        %v704 = vmul.f32 %v559, %v559
        %v705 = vmul.f32 %v560, %v560
        %v706 = vmul.f32 %v561, %v561
        %v707 = vmul.f32 %v562, %v562
        %v708 = vmul.f32 %v563, %v563
        %v709 = vmul.f32 %v564, %v564
        %v710 = vmul.f32 %v565, %v565
        %v711 = vmul.f32 %v566, %v566
        %v712 = vmul.f32 %v567, %v567
        %v713 = vmul.f32 %v568, %v568
        %v714 = vmul.f32 %v569, %v569
        %v715 = vmul.f32 %v570, %v570
        %v716 = vmul.f32 %v571, %v571
        %v717 = vmul.f32 %v572, %v572
        %v718 = vmul.f32 %v573, %v573
        %v719 = vmul.f32 %v574, %v574
        %v720 = vmul.f32 %v575, %v575
        %v721 = vadd.f32 %v689, %v690
        %722 = vadd.xlane.f32.xlu0 %v721
        %v723 = vpop.xlane.xlu0 %722
        %v724 = vadd.f32 %v691, %v692
        %725 = vadd.xlane.f32.xlu0 %v724
        %v726 = vpop.xlane.xlu0 %725
        %v727 = vadd.f32 %v693, %v694
        %728 = vadd.xlane.f32.xlu0 %v727
        %v729 = vpop.xlane.xlu0 %728
        %v730 = vadd.f32 %v695, %v696
        %731 = vadd.xlane.f32.xlu0 %v730
        %v732 = vpop.xlane.xlu0 %731
        %v733 = vadd.f32 %v697, %v698
        %734 = vadd.xlane.f32.xlu0 %v733
        %v735 = vpop.xlane.xlu0 %734
        %v736 = vadd.f32 %v699, %v700
        %737 = vadd.xlane.f32.xlu0 %v736
        %v738 = vpop.xlane.xlu0 %737
        %v739 = vadd.f32 %v701, %v702
        %740 = vadd.xlane.f32.xlu0 %v739
        %v741 = vpop.xlane.xlu0 %740
        %v742 = vadd.f32 %v703, %v704
        %743 = vadd.xlane.f32.xlu0 %v742
        %v744 = vpop.xlane.xlu0 %743
        %v745 = vadd.f32 %v705, %v706
        %746 = vadd.xlane.f32.xlu0 %v745
        %v747 = vpop.xlane.xlu0 %746
        %v748 = vadd.f32 %v707, %v708
        %749 = vadd.xlane.f32.xlu0 %v748
        %v750 = vpop.xlane.xlu0 %749
        %v751 = vadd.f32 %v709, %v710
        %752 = vadd.xlane.f32.xlu0 %v751
        %v753 = vpop.xlane.xlu0 %752
        %v754 = vadd.f32 %v711, %v712
        %755 = vadd.xlane.f32.xlu0 %v754
        %v756 = vpop.xlane.xlu0 %755
        %v757 = vadd.f32 %v713, %v714
        %758 = vadd.xlane.f32.xlu0 %v757
        %v759 = vpop.xlane.xlu0 %758
        %v760 = vadd.f32 %v715, %v716
        %761 = vadd.xlane.f32.xlu0 %v760
        %v762 = vpop.xlane.xlu0 %761
        %v763 = vadd.f32 %v717, %v718
        %764 = vadd.xlane.f32.xlu0 %v763
        %v765 = vpop.xlane.xlu0 %764
        %v766 = vadd.f32 %v719, %v720
        %767 = vadd.xlane.f32.xlu0 %v766
        %v768 = vpop.xlane.xlu0 %767
        %v769 = vadd.f32 %v673, %v723
        %v770 = vadd.f32 %v674, %v726
        %v771 = vadd.f32 %v675, %v729
        %v772 = vadd.f32 %v676, %v732
        %v773 = vadd.f32 %v677, %v735
        %v774 = vadd.f32 %v678, %v738
        %v775 = vadd.f32 %v679, %v741
        %v776 = vadd.f32 %v680, %v744
        %v777 = vadd.f32 %v681, %v747
        %v778 = vadd.f32 %v682, %v750
        %v779 = vadd.f32 %v683, %v753
        %v780 = vadd.f32 %v684, %v756
        %v781 = vadd.f32 %v685, %v759
        %v782 = vadd.f32 %v686, %v762
        %v783 = vadd.f32 %v687, %v765
        %v784 = vadd.f32 %v688, %v768
        %vm785 = vcmask 15368
        %786 = vst.msk [vmem:[#allocation2] sm:$0xff] %vm785, %v769
        %787 = vst.msk [vmem:[#allocation2 + $0x8] sm:$0xff] %vm785, %v770
        %788 = vst.msk [vmem:[#allocation2 + $0x10] sm:$0xff] %vm785, %v771
        %789 = vst.msk [vmem:[#allocation2 + $0x18] sm:$0xff] %vm785, %v772
        %790 = vst.msk [vmem:[#allocation2 + $0x20] sm:$0xff] %vm785, %v773
        %791 = vst.msk [vmem:[#allocation2 + $0x28] sm:$0xff] %vm785, %v774
        %792 = vst.msk [vmem:[#allocation2 + $0x30] sm:$0xff] %vm785, %v775
        %793 = vst.msk [vmem:[#allocation2 + $0x38] sm:$0xff] %vm785, %v776
        %794 = vst.msk [vmem:[#allocation2 + $0x40] sm:$0xff] %vm785, %v777
        %795 = vst.msk [vmem:[#allocation2 + $0x48] sm:$0xff] %vm785, %v778
        %796 = vst.msk [vmem:[#allocation2 + $0x50] sm:$0xff] %vm785, %v779
        %797 = vst.msk [vmem:[#allocation2 + $0x58] sm:$0xff] %vm785, %v780
        %798 = vst.msk [vmem:[#allocation2 + $0x60] sm:$0xff] %vm785, %v781
        %799 = vst.msk [vmem:[#allocation2 + $0x68] sm:$0xff] %vm785, %v782
        %800 = vst.msk [vmem:[#allocation2 + $0x70] sm:$0xff] %vm785, %v783
        %801 = vst.msk [vmem:[#allocation2 + $0x78] sm:$0xff] %vm785, %v784
        // Predicated region
        $region41: #{tpu_custom_call.1} parent=31 // pred_check
          %p802 = pneg %p209
        $region42: #{tpu_custom_call.1} parent=31 // pred_check_branch
          %804 = sbr.rel (%p802) target = $region44
        $region43: #{tpu_custom_call.1} parent=31 // pred_region
          %v805 = vld [vmem:[#allocation2] sm:$0xff]
          %v806 = vld [vmem:[#allocation2 + $0x8] sm:$0xff]
          %v807 = vld [vmem:[#allocation2 + $0x10] sm:$0xff]
          %v808 = vld [vmem:[#allocation2 + $0x18] sm:$0xff]
          %v809 = vld [vmem:[#allocation2 + $0x20] sm:$0xff]
          %v810 = vld [vmem:[#allocation2 + $0x28] sm:$0xff]
          %v811 = vld [vmem:[#allocation2 + $0x30] sm:$0xff]
          %v812 = vld [vmem:[#allocation2 + $0x38] sm:$0xff]
          %v813 = vld [vmem:[#allocation2 + $0x40] sm:$0xff]
          %v814 = vld [vmem:[#allocation2 + $0x48] sm:$0xff]
          %v815 = vld [vmem:[#allocation2 + $0x50] sm:$0xff]
          %v816 = vld [vmem:[#allocation2 + $0x58] sm:$0xff]
          %v817 = vld [vmem:[#allocation2 + $0x60] sm:$0xff]
          %v818 = vld [vmem:[#allocation2 + $0x68] sm:$0xff]
          %v819 = vld [vmem:[#allocation2 + $0x70] sm:$0xff]
          %v820 = vld [vmem:[#allocation2 + $0x78] sm:$0xff]
          %vm821 = vcmask 15360
          %822 = vst.msk [vmem:[%s207] sm:$0xff] %vm821, %v805
          %823 = vst.msk [vmem:[%s207 + $0x8] sm:$0xff] %vm821, %v806
          %824 = vst.msk [vmem:[%s207 + $0x10] sm:$0xff] %vm821, %v807
          %825 = vst.msk [vmem:[%s207 + $0x18] sm:$0xff] %vm821, %v808
          %826 = vst.msk [vmem:[%s207 + $0x20] sm:$0xff] %vm821, %v809
          %827 = vst.msk [vmem:[%s207 + $0x28] sm:$0xff] %vm821, %v810
          %828 = vst.msk [vmem:[%s207 + $0x30] sm:$0xff] %vm821, %v811
          %829 = vst.msk [vmem:[%s207 + $0x38] sm:$0xff] %vm821, %v812
          %830 = vst.msk [vmem:[%s207 + $0x40] sm:$0xff] %vm821, %v813
          %831 = vst.msk [vmem:[%s207 + $0x48] sm:$0xff] %vm821, %v814
          %832 = vst.msk [vmem:[%s207 + $0x50] sm:$0xff] %vm821, %v815
          %833 = vst.msk [vmem:[%s207 + $0x58] sm:$0xff] %vm821, %v816
          %834 = vst.msk [vmem:[%s207 + $0x60] sm:$0xff] %vm821, %v817
          %835 = vst.msk [vmem:[%s207 + $0x68] sm:$0xff] %vm821, %v818
          %836 = vst.msk [vmem:[%s207 + $0x70] sm:$0xff] %vm821, %v819
          %837 = vst.msk [vmem:[%s207 + $0x78] sm:$0xff] %vm821, %v820
        $region44: #{tpu_custom_call.1} parent=31 // pred_fallthru
          _
        %p838 = scmp.lt.s32.totalorder %s21, 1
        %s839 = scalar_select %p838, %s21, 1
        %s840 = smul.addr %s839, 16
        %s841 = smul.addr %s840, 8
        %s842 = scalar_lea.vmem %s3, %s841
        // Predicated region
        $region45: #{tpu_custom_call.1} parent=31 // pred_check
          %p843 = pneg %p117
        $region46: #{tpu_custom_call.1} parent=31 // pred_check_branch
          %845 = sbr.rel (%p843) target = $region48
        $region47: #{tpu_custom_call.1} parent=31 // pred_region
          _
        $region48: #{tpu_custom_call.1} parent=31 // pred_fallthru
          _
      $region32: #{tpu_custom_call.1} parent=5 // pred_fallthru
        _
      %p846 = scmp.le.s32.totalorder 2, %s12
      // Predicated region
      $region49: #{tpu_custom_call.1} parent=5 // pred_check
        %p847 = pneg %p846
      $region50: #{tpu_custom_call.1} parent=5 // pred_check_branch
        %849 = sbr.rel (%p847) target = $region52
      $region51: #{tpu_custom_call.1} parent=5 // pred_region
        %s850 = ssub.s32 %s12, 2
        // Predicated region
        $region53: #{tpu_custom_call.1} parent=51 // pred_check
          %p851 = pneg %p123
        $region54: #{tpu_custom_call.1} parent=51 // pred_check_branch
          %853 = sbr.rel (%p851) target = $region56
        $region55: #{tpu_custom_call.1} parent=51 // pred_region
          %p854 = scmp.lt.s32.totalorder %s23, 1
          %s855 = scalar_select %p854, %s23, 1
          %s856 = smul.addr %s855, 16
          %s857 = smul.addr %s856, 8
          %s858 = scalar_lea.vmem %s3, %s857
        $region56: #{tpu_custom_call.1} parent=51 // pred_fallthru
          _
      $region52: #{tpu_custom_call.1} parent=5 // pred_fallthru
        _
    $region6: #{tpu_custom_call.1} parent=1 // loop_footer
      %s16 = sadd.s32 1, %s12
    $region7: #{tpu_custom_call.1} parent=1 // loop_footer_branch
      %11 = sbr.rel target = $region3
    $region8: #{tpu_custom_call.1} parent=1 // loop_exit
      _
    %859 = vsyncpa [#allocation4], 1
    %s860 = scalar_lea.sflag [#allocation4], 1
    %861 = vsyncpa %s860, 1

</llo_original>
